<compile_context>
chip_gen: v5e
topology: v5e:2x2
jax: 0.10.0
libtpu: 0.0.40
codegen_flags: <defaults>
</compile_context>

<pallas_src>
import functools

import jax
import jax.numpy as jnp
from jax.experimental import pallas as pl
from jax.experimental.pallas import tpu as pltpu


# ----------------------------- helpers --------------------------------------

def _pick_tile(dim, preferred, multiple):
    """Largest tile <= preferred that divides dim and is a multiple of `multiple`,
    falling back to the full dim (always legal per the (8,128) rule)."""
    if dim <= preferred:
        return dim
    for t in range(preferred, multiple - 1, -multiple):
        if dim % t == 0:
            return t
    return dim


# ----------------------------- tiled linear kernel ---------------------------

def _linear_kernel(x_ref, w_ref, b_ref, o_ref, acc_ref):
    # x: (tm, tk), w: (tk, tn) [already transposed], b: (1, tn), o: (tm, tn)
    @pl.when(pl.program_id(2) == 0)
    def _():
        acc_ref[...] = jnp.zeros_like(acc_ref)

    acc_ref[...] += jnp.dot(x_ref[...], w_ref[...],
                            preferred_element_type=jnp.float32)

    @pl.when(pl.program_id(2) == pl.num_programs(2) - 1)
    def _():
        o_ref[...] = (acc_ref[...] + b_ref[...].astype(jnp.float32)).astype(o_ref.dtype)


def pallas_linear(x, w_t, b, *, tm_pref=256, tn_pref=512, tk_pref=512):
    """o = x @ w_t + b, with x:(M,K), w_t:(K,N) (weight pre-transposed), b:(N,)."""
    M, K = x.shape
    K2, N = w_t.shape
    assert K == K2
    tm = _pick_tile(M, tm_pref, 8)
    tn = _pick_tile(N, tn_pref, 128)
    tk = _pick_tile(K, tk_pref, 128)
    b2 = b.reshape(1, N)
    return pl.pallas_call(
        _linear_kernel,
        out_shape=jax.ShapeDtypeStruct((M, N), x.dtype),
        grid=(M // tm, N // tn, K // tk),
        in_specs=[
            pl.BlockSpec((tm, tk), lambda i, j, k: (i, k)),
            pl.BlockSpec((tk, tn), lambda i, j, k: (k, j)),
            pl.BlockSpec((1, tn), lambda i, j, k: (0, j)),
        ],
        out_specs=pl.BlockSpec((tm, tn), lambda i, j, k: (i, j)),
        scratch_shapes=[pltpu.VMEM((tm, tn), jnp.float32)],
        compiler_params=pltpu.CompilerParams(
            dimension_semantics=("parallel", "parallel", "arbitrary")),
    )(x, w_t, b2)


# ----------------------------- attention kernel ------------------------------

def _attn_kernel(q_ref, k_ref, v_ref, o_ref, w_ref):
    # q_ref: (1, H, tq, hd); k_ref, v_ref: (1, H, S, hd)
    q = q_ref[0]
    k = k_ref[0]
    v = v_ref[0]
    H = q.shape[0]

    # scores per head, accumulate f32 on the MXU (no explicit transpose of k)
    s = jnp.einsum('htd,hsd->hts', q, k,
                   preferred_element_type=jnp.float32)          # (H, tq, S)

    # numerically stable softmax in f32; divide via EUP approx reciprocal
    m = jnp.max(s, axis=-1, keepdims=True)
    e = jnp.exp(s - m)
    denom = jnp.sum(e, axis=-1, keepdims=True)
    p = e * pl.reciprocal(denom, approx=True)                   # (H, tq, S) f32

    o = jnp.einsum('hts,hsd->htd', p.astype(v.dtype), v,
                   preferred_element_type=jnp.float32)          # (H, tq, hd)

    o_ref[0] = o.astype(o_ref.dtype)
    # head-averaged attention weights, written directly (no per-head HBM tensor)
    w_ref[0] = (jnp.sum(p, axis=0) * (1.0 / H)).astype(w_ref.dtype)


def pallas_attention(q, k, v):
    """q: (B, H, T, hd); k, v: (B, H, S, hd) -> (attn (B,H,T,hd), weights (B,T,S))."""
    B, H, T, hd = q.shape
    S = k.shape[2]
    tq = _pick_tile(T, 128, 8)
    return pl.pallas_call(
        _attn_kernel,
        out_shape=(
            jax.ShapeDtypeStruct((B, H, T, hd), q.dtype),
            jax.ShapeDtypeStruct((B, T, S), jnp.float32),
        ),
        grid=(B, T // tq),
        in_specs=[
            pl.BlockSpec((1, H, tq, hd), lambda b, qi: (b, 0, qi, 0)),
            pl.BlockSpec((1, H, S, hd), lambda b, qi: (b, 0, 0, 0)),
            pl.BlockSpec((1, H, S, hd), lambda b, qi: (b, 0, 0, 0)),
        ],
        out_specs=(
            pl.BlockSpec((1, H, tq, hd), lambda b, qi: (b, 0, qi, 0)),
            pl.BlockSpec((1, tq, S), lambda b, qi: (b, qi, 0)),
        ),
        compiler_params=pltpu.CompilerParams(
            dimension_semantics=("parallel", "parallel")),
    )(q, k, v)


# ----------------------------- module forward --------------------------------

def multihead_self_attention(params, x, num_heads):
    """Self-attention forward (query is key is value). x: (T, B, E)."""
    T, B, E = x.shape
    H = num_heads
    hd = E // H
    S = T
    scaling = float(hd) ** -0.5

    W_in = params["in_proj_weight"]      # (3E, E)
    b_in = params["in_proj_bias"]        # (3E,)
    W_out = params["out_proj_weight"]    # (E, E)
    b_out = params["out_proj_bias"]      # (E,)

    # Fold the q scaling into the Q rows of the input projection (exact algebra),
    # and pre-transpose weights once so the kernels feed the MXU natural layout.
    scale_vec = jnp.concatenate(
        [jnp.full((E,), scaling, W_in.dtype), jnp.ones((2 * E,), W_in.dtype)])
    W_in_t = (W_in * scale_vec[:, None]).T        # (E, 3E)
    b_in_s = b_in * scale_vec
    W_out_t = W_out.T                             # (E, E)

    # batch-major token slab: (B*T, E)
    x_bt = x.transpose(1, 0, 2).reshape(B * T, E)

    # fused Q/K/V projection (one tiled, pipelined matmul)
    qkv = pallas_linear(x_bt, W_in_t, b_in_s)                    # (B*T, 3E)

    # split heads: one fused XLA layout pass -> (3, B, H, T, hd)
    qkv = qkv.reshape(B, T, 3, H, hd).transpose(2, 0, 3, 1, 4)
    q, k, v = qkv[0], qkv[1], qkv[2]

    attn_bh, attn_weights = pallas_attention(q, k, v)            # (B,H,T,hd), (B,T,S)

    # merge heads and output projection
    attn = attn_bh.transpose(0, 2, 1, 3).reshape(B * T, E)
    attn = pallas_linear(attn, W_out_t, b_out)                   # (B*T, E)
    attn = attn.reshape(B, T, E).transpose(1, 0, 2)              # back to (T, B, E)

    return attn, attn_weights


# ----------------------------- plain JAX reference ---------------------------

def reference(params, x, H):
    T, B, E = x.shape
    hd = E // H
    W, bias = params["in_proj_weight"], params["in_proj_bias"]
    qkv = x @ W.T + bias
    q, k, v = jnp.split(qkv, 3, axis=-1)
    q = q * (float(hd) ** -0.5)

    def split_heads(t):
        return t.reshape(T, B * H, hd).transpose(1, 0, 2)

    q, k, v = split_heads(q), split_heads(k), split_heads(v)
    s = jnp.einsum("bqd,bkd->bqk", q, k)
    p = jax.nn.softmax(s.astype(jnp.float32), axis=-1)
    attn = jnp.einsum("bqk,bkd->bqd", p.astype(v.dtype), v)
    attn = attn.transpose(1, 0, 2).reshape(T, B, E)
    attn = attn @ params["out_proj_weight"].T + params["out_proj_bias"]
    w = p.reshape(B, H, T, T).sum(1) / H
    return attn, w


# ----------------------------- main -------------------------------------------

if __name__ == "__main__":
    T, B, E, H = 8, 2, 32, 4

    key = jax.random.PRNGKey(0)
    k1, k2, k3, k4, k5 = jax.random.split(key, 5)

    # xavier_uniform weights; small random biases to exercise the bias path
    a_in = (6.0 / (E + 3 * E)) ** 0.5
    in_proj_weight = jax.random.uniform(k1, (3 * E, E), jnp.float32, -a_in, a_in)
    a_out = (6.0 / (2 * E)) ** 0.5
    out_proj_weight = jax.random.uniform(k2, (E, E), jnp.float32, -a_out, a_out)
    params = dict(
        in_proj_weight=in_proj_weight,
        in_proj_bias=0.02 * jax.random.normal(k4, (3 * E,), jnp.float32),
        out_proj_weight=out_proj_weight,
        out_proj_bias=0.02 * jax.random.normal(k5, (E,), jnp.float32),
    )

    x = jax.random.normal(k3, (T, B, E), jnp.float32)

    fn = jax.jit(functools.partial(multihead_self_attention, num_heads=H))
    attn, attn_w = fn(params, x)
    jax.block_until_ready((attn, attn_w))

    ref_attn, ref_w = reference(params, x, H)
    assert attn.shape == (T, B, E) and attn_w.shape == (B, T, T)
    assert jnp.allclose(attn, ref_attn, atol=5e-3, rtol=5e-3), "attn mismatch"
    assert jnp.allclose(attn_w, ref_w, atol=5e-3, rtol=5e-3), "weights mismatch"

    print("KERNEL_OK")
</pallas_src>

<mosaic_0001>
module attributes {stable_mosaic.version = 11 : i64} {
  func.func @_linear_kernel(%arg0: i32, %arg1: i32, %arg2: i32, %arg3: memref<16x32xf32, #tpu.memory_space<vmem>>, %arg4: memref<32x96xf32, #tpu.memory_space<vmem>>, %arg5: memref<1x96xf32, #tpu.memory_space<vmem>>, %arg6: memref<16x96xf32, #tpu.memory_space<vmem>>, %arg7: memref<16x96xf32, #tpu.memory_space<vmem>>) attributes {dimension_semantics = [#tpu.dimension_semantics<parallel>, #tpu.dimension_semantics<parallel>, #tpu.dimension_semantics<arbitrary>], iteration_bounds = array<i64: 1, 1, 1>, scalar_prefetch = 0 : i64, scratch_operands = 1 : i64, tpu.core_type = #tpu.core_type<tc>, window_params = [{transform_indices = @transform_0, window_bounds = array<i64: 16, 32>}, {transform_indices = @transform_1, window_bounds = array<i64: 32, 96>}, {transform_indices = @transform_2, window_bounds = array<i64: 1, 96>}, {transform_indices = @transform_3, window_bounds = array<i64: 16, 96>}]} {
    %c0_i32 = arith.constant 0 : i32
    %0 = arith.cmpi eq, %arg2, %c0_i32 : i32
    %1 = arith.extui %0 : i1 to i32
    %c0_i32_0 = arith.constant 0 : i32
    %2 = arith.cmpi ne, %1, %c0_i32_0 : i32
    scf.if %2 {
      %cst_10 = arith.constant 0.000000e+00 : f32
      %12 = vector.broadcast %cst_10 : f32 to vector<16x96xf32>
      %c0_11 = arith.constant 0 : index
      %c0_12 = arith.constant 0 : index
      %13 = vector.load %arg7[%c0_11, %c0_12] : memref<16x96xf32, #tpu.memory_space<vmem>>, vector<16x96xf32>
      tpu.vector_store %arg7[%c0_11, %c0_12], %12 {strides = array<i32>} : memref<16x96xf32, #tpu.memory_space<vmem>>, vector<16x96xf32>,
    } else {
    }
    %c0 = arith.constant 0 : index
    %c0_1 = arith.constant 0 : index
    %3 = vector.load %arg7[%c0, %c0_1] : memref<16x96xf32, #tpu.memory_space<vmem>>, vector<16x96xf32>
    %c0_2 = arith.constant 0 : index
    %c0_3 = arith.constant 0 : index
    %4 = vector.load %arg3[%c0_2, %c0_3] : memref<16x32xf32, #tpu.memory_space<vmem>>, vector<16x32xf32>
    %c0_4 = arith.constant 0 : index
    %c0_5 = arith.constant 0 : index
    %5 = vector.load %arg4[%c0_4, %c0_5] : memref<32x96xf32, #tpu.memory_space<vmem>>, vector<32x96xf32>
    %cst = arith.constant dense<0.000000e+00> : vector<16x96xf32>
    %6 = tpu.matmul %4, %5, %cst {dimension_numbers = #tpu.dot_dimension_numbers<[1], [0], [0], [1], [0, 0, 1, 1], [], []>} : vector<16x32xf32>, vector<32x96xf32>, vector<16x96xf32> -> vector<16x96xf32>
    %7 = arith.addf %3, %6 : vector<16x96xf32>
    %c0_6 = arith.constant 0 : index
    %c0_7 = arith.constant 0 : index
    %8 = vector.load %arg7[%c0_6, %c0_7] : memref<16x96xf32, #tpu.memory_space<vmem>>, vector<16x96xf32>
    tpu.vector_store %arg7[%c0_6, %c0_7], %7 {strides = array<i32>} : memref<16x96xf32, #tpu.memory_space<vmem>>, vector<16x96xf32>,
    %c0_i32_8 = arith.constant 0 : i32
    %9 = arith.cmpi eq, %arg2, %c0_i32_8 : i32
    %10 = arith.extui %9 : i1 to i32
    %c0_i32_9 = arith.constant 0 : i32
    %11 = arith.cmpi ne, %10, %c0_i32_9 : i32
    scf.if %11 {
      %c0_10 = arith.constant 0 : index
      %c0_11 = arith.constant 0 : index
      %12 = vector.load %arg7[%c0_10, %c0_11] : memref<16x96xf32, #tpu.memory_space<vmem>>, vector<16x96xf32>
      %c0_12 = arith.constant 0 : index
      %c0_13 = arith.constant 0 : index
      %13 = vector.load %arg5[%c0_12, %c0_13] : memref<1x96xf32, #tpu.memory_space<vmem>>, vector<1x96xf32>
      %14 = vector.broadcast %13 : vector<1x96xf32> to vector<16x96xf32>
      %15 = arith.addf %12, %14 : vector<16x96xf32>
      %c0_14 = arith.constant 0 : index
      %c0_15 = arith.constant 0 : index
      %16 = vector.load %arg6[%c0_14, %c0_15] : memref<16x96xf32, #tpu.memory_space<vmem>>, vector<16x96xf32>
      tpu.vector_store %arg6[%c0_14, %c0_15], %15 {strides = array<i32>} : memref<16x96xf32, #tpu.memory_space<vmem>>, vector<16x96xf32>,
    } else {
    }
    return
  }
  func.func @transform_0(%arg0: i32, %arg1: i32, %arg2: i32) -> (i32, i32) {
    %c0_i32 = arith.constant 0 : i32
    return %arg0, %arg2 : i32, i32
  }
  func.func @transform_1(%arg0: i32, %arg1: i32, %arg2: i32) -> (i32, i32) {
    %c0_i32 = arith.constant 0 : i32
    return %arg2, %arg1 : i32, i32
  }
  func.func @transform_2(%arg0: i32, %arg1: i32, %arg2: i32) -> (i32, i32) {
    %c0_i32 = arith.constant 0 : i32
    %c0_i32_0 = arith.constant 0 : i32
    return %c0_i32, %arg1 : i32, i32
  }
  func.func @transform_3(%arg0: i32, %arg1: i32, %arg2: i32) -> (i32, i32) {
    %c0_i32 = arith.constant 0 : i32
    return %arg0, %arg1 : i32, i32
  }
}

module attributes {stable_mosaic.version = 11 : i64} {
  func.func @_attn_kernel(%arg0: i32, %arg1: i32, %arg2: memref<1x4x8x8xf32, #tpu.memory_space<vmem>>, %arg3: memref<1x4x8x8xf32, #tpu.memory_space<vmem>>, %arg4: memref<1x4x8x8xf32, #tpu.memory_space<vmem>>, %arg5: memref<1x4x8x8xf32, #tpu.memory_space<vmem>>, %arg6: memref<1x8x8xf32, #tpu.memory_space<vmem>>) attributes {dimension_semantics = [#tpu.dimension_semantics<parallel>, #tpu.dimension_semantics<parallel>], iteration_bounds = array<i64: 2, 1>, scalar_prefetch = 0 : i64, scratch_operands = 0 : i64, tpu.core_type = #tpu.core_type<tc>, window_params = [{transform_indices = @transform_0, window_bounds = array<i64: 1, 4, 8, 8>}, {transform_indices = @transform_1, window_bounds = array<i64: 1, 4, 8, 8>}, {transform_indices = @transform_2, window_bounds = array<i64: 1, 4, 8, 8>}, {transform_indices = @transform_3, window_bounds = array<i64: 1, 4, 8, 8>}, {transform_indices = @transform_4, window_bounds = array<i64: 1, 8, 8>}]} {
    %c0 = arith.constant 0 : index
    %c0_0 = arith.constant 0 : index
    %c0_1 = arith.constant 0 : index
    %c0_2 = arith.constant 0 : index
    %0 = vector.load %arg2[%c0, %c0_0, %c0_1, %c0_2] : memref<1x4x8x8xf32, #tpu.memory_space<vmem>>, vector<1x4x8x8xf32>
    %1 = vector.shape_cast %0 : vector<1x4x8x8xf32> to vector<4x8x8xf32>
    %c0_3 = arith.constant 0 : index
    %c0_4 = arith.constant 0 : index
    %c0_5 = arith.constant 0 : index
    %c0_6 = arith.constant 0 : index
    %2 = vector.load %arg3[%c0_3, %c0_4, %c0_5, %c0_6] : memref<1x4x8x8xf32, #tpu.memory_space<vmem>>, vector<1x4x8x8xf32>
    %3 = vector.shape_cast %2 : vector<1x4x8x8xf32> to vector<4x8x8xf32>
    %c0_7 = arith.constant 0 : index
    %c0_8 = arith.constant 0 : index
    %c0_9 = arith.constant 0 : index
    %c0_10 = arith.constant 0 : index
    %4 = vector.load %arg4[%c0_7, %c0_8, %c0_9, %c0_10] : memref<1x4x8x8xf32, #tpu.memory_space<vmem>>, vector<1x4x8x8xf32>
    %5 = vector.shape_cast %4 : vector<1x4x8x8xf32> to vector<4x8x8xf32>
    "tpu.trace_start"() <{level = 10 : i32, message = "htd,hsd->hts"}> : () -> ()
    %cst = arith.constant dense<0.000000e+00> : vector<4x8x8xf32>
    %6 = tpu.matmul %1, %3, %cst {dimension_numbers = #tpu.dot_dimension_numbers<[2], [2], [1], [1], [0, 0, 0, 1, 1, 1], [0], [0]>} : vector<4x8x8xf32>, vector<4x8x8xf32>, vector<4x8x8xf32> -> vector<4x8x8xf32>
    "tpu.trace_stop"() : () -> ()
    %cst_11 = arith.constant dense<0xFF800000> : vector<4x8xf32>
    %7 = vector.multi_reduction <maximumf>, %6, %cst_11 [2] : vector<4x8x8xf32> to vector<4x8xf32>
    %8 = vector.shape_cast %7 : vector<4x8xf32> to vector<4x8x1xf32>
    %9 = vector.broadcast %8 : vector<4x8x1xf32> to vector<4x8x8xf32>
    %10 = arith.subf %6, %9 : vector<4x8x8xf32>
    %11 = math.exp %10 : vector<4x8x8xf32>
    %cst_12 = arith.constant dense<0.000000e+00> : vector<4x8xf32>
    %12 = vector.multi_reduction <add>, %11, %cst_12 [2] : vector<4x8x8xf32> to vector<4x8xf32>
    %13 = vector.shape_cast %12 : vector<4x8xf32> to vector<4x8x1xf32>
    %14 = tpu.reciprocal %13 {approx = true} : vector<4x8x1xf32> -> vector<4x8x1xf32>
    %15 = vector.broadcast %14 : vector<4x8x1xf32> to vector<4x8x8xf32>
    %16 = arith.mulf %11, %15 : vector<4x8x8xf32>
    "tpu.trace_start"() <{level = 10 : i32, message = "hts,hsd->htd"}> : () -> ()
    %cst_13 = arith.constant dense<0.000000e+00> : vector<4x8x8xf32>
    %17 = tpu.matmul %16, %5, %cst_13 {dimension_numbers = #tpu.dot_dimension_numbers<[2], [1], [1], [2], [0, 0, 0, 1, 1, 2], [0], [0]>} : vector<4x8x8xf32>, vector<4x8x8xf32>, vector<4x8x8xf32> -> vector<4x8x8xf32>
    "tpu.trace_stop"() : () -> ()
    %c0_14 = arith.constant 0 : index
    %c0_15 = arith.constant 0 : index
    %c0_16 = arith.constant 0 : index
    %c0_17 = arith.constant 0 : index
    %18 = vector.load %arg5[%c0_14, %c0_15, %c0_16, %c0_17] : memref<1x4x8x8xf32, #tpu.memory_space<vmem>>, vector<1x4x8x8xf32>
    %19 = vector.shape_cast %18 : vector<1x4x8x8xf32> to vector<4x8x8xf32>
    %20 = vector.shape_cast %17 : vector<4x8x8xf32> to vector<1x4x8x8xf32>
    tpu.vector_store %arg5[%c0_14, %c0_15, %c0_16, %c0_17], %20 {strides = array<i32>} : memref<1x4x8x8xf32, #tpu.memory_space<vmem>>, vector<1x4x8x8xf32>,
    %cst_18 = arith.constant dense<0.000000e+00> : vector<8x8xf32>
    %21 = vector.multi_reduction <add>, %16, %cst_18 [0] : vector<4x8x8xf32> to vector<8x8xf32>
    %cst_19 = arith.constant 2.500000e-01 : f32
    %22 = vector.broadcast %cst_19 : f32 to vector<8x8xf32>
    %23 = arith.mulf %21, %22 : vector<8x8xf32>
    %c0_20 = arith.constant 0 : index
    %c0_21 = arith.constant 0 : index
    %c0_22 = arith.constant 0 : index
    %24 = vector.load %arg6[%c0_20, %c0_21, %c0_22] : memref<1x8x8xf32, #tpu.memory_space<vmem>>, vector<1x8x8xf32>
    %25 = vector.shape_cast %24 : vector<1x8x8xf32> to vector<8x8xf32>
    %26 = vector.shape_cast %23 : vector<8x8xf32> to vector<1x8x8xf32>
    tpu.vector_store %arg6[%c0_20, %c0_21, %c0_22], %26 {strides = array<i32>} : memref<1x8x8xf32, #tpu.memory_space<vmem>>, vector<1x8x8xf32>,
    return
  }
  func.func @transform_0(%arg0: i32, %arg1: i32) -> (i32, i32, i32, i32) {
    %c0_i32 = arith.constant 0 : i32
    %c0_i32_0 = arith.constant 0 : i32
    %c0_i32_1 = arith.constant 0 : i32
    return %arg0, %c0_i32, %arg1, %c0_i32_0 : i32, i32, i32, i32
  }
  func.func @transform_1(%arg0: i32, %arg1: i32) -> (i32, i32, i32, i32) {
    %c0_i32 = arith.constant 0 : i32
    %c0_i32_0 = arith.constant 0 : i32
    %c0_i32_1 = arith.constant 0 : i32
    %c0_i32_2 = arith.constant 0 : i32
    return %arg0, %c0_i32, %c0_i32_0, %c0_i32_1 : i32, i32, i32, i32
  }
  func.func @transform_2(%arg0: i32, %arg1: i32) -> (i32, i32, i32, i32) {
    %c0_i32 = arith.constant 0 : i32
    %c0_i32_0 = arith.constant 0 : i32
    %c0_i32_1 = arith.constant 0 : i32
    %c0_i32_2 = arith.constant 0 : i32
    return %arg0, %c0_i32, %c0_i32_0, %c0_i32_1 : i32, i32, i32, i32
  }
  func.func @transform_3(%arg0: i32, %arg1: i32) -> (i32, i32, i32, i32) {
    %c0_i32 = arith.constant 0 : i32
    %c0_i32_0 = arith.constant 0 : i32
    %c0_i32_1 = arith.constant 0 : i32
    return %arg0, %c0_i32, %arg1, %c0_i32_0 : i32, i32, i32, i32
  }
  func.func @transform_4(%arg0: i32, %arg1: i32) -> (i32, i32, i32) {
    %c0_i32 = arith.constant 0 : i32
    %c0_i32_0 = arith.constant 0 : i32
    return %arg0, %arg1, %c0_i32 : i32, i32, i32
  }
}

module attributes {stable_mosaic.version = 11 : i64} {
  func.func @_linear_kernel(%arg0: i32, %arg1: i32, %arg2: i32, %arg3: memref<16x32xf32, #tpu.memory_space<vmem>>, %arg4: memref<32x32xf32, #tpu.memory_space<vmem>>, %arg5: memref<1x32xf32, #tpu.memory_space<vmem>>, %arg6: memref<16x32xf32, #tpu.memory_space<vmem>>, %arg7: memref<16x32xf32, #tpu.memory_space<vmem>>) attributes {dimension_semantics = [#tpu.dimension_semantics<parallel>, #tpu.dimension_semantics<parallel>, #tpu.dimension_semantics<arbitrary>], iteration_bounds = array<i64: 1, 1, 1>, scalar_prefetch = 0 : i64, scratch_operands = 1 : i64, tpu.core_type = #tpu.core_type<tc>, window_params = [{transform_indices = @transform_0, window_bounds = array<i64: 16, 32>}, {transform_indices = @transform_1, window_bounds = array<i64: 32, 32>}, {transform_indices = @transform_2, window_bounds = array<i64: 1, 32>}, {transform_indices = @transform_3, window_bounds = array<i64: 16, 32>}]} {
    %c0_i32 = arith.constant 0 : i32
    %0 = arith.cmpi eq, %arg2, %c0_i32 : i32
    %1 = arith.extui %0 : i1 to i32
    %c0_i32_0 = arith.constant 0 : i32
    %2 = arith.cmpi ne, %1, %c0_i32_0 : i32
    scf.if %2 {
      %cst_10 = arith.constant 0.000000e+00 : f32
      %12 = vector.broadcast %cst_10 : f32 to vector<16x32xf32>
      %c0_11 = arith.constant 0 : index
      %c0_12 = arith.constant 0 : index
      %13 = vector.load %arg7[%c0_11, %c0_12] : memref<16x32xf32, #tpu.memory_space<vmem>>, vector<16x32xf32>
      tpu.vector_store %arg7[%c0_11, %c0_12], %12 {strides = array<i32>} : memref<16x32xf32, #tpu.memory_space<vmem>>, vector<16x32xf32>,
    } else {
    }
    %c0 = arith.constant 0 : index
    %c0_1 = arith.constant 0 : index
    %3 = vector.load %arg7[%c0, %c0_1] : memref<16x32xf32, #tpu.memory_space<vmem>>, vector<16x32xf32>
    %c0_2 = arith.constant 0 : index
    %c0_3 = arith.constant 0 : index
    %4 = vector.load %arg3[%c0_2, %c0_3] : memref<16x32xf32, #tpu.memory_space<vmem>>, vector<16x32xf32>
    %c0_4 = arith.constant 0 : index
    %c0_5 = arith.constant 0 : index
    %5 = vector.load %arg4[%c0_4, %c0_5] : memref<32x32xf32, #tpu.memory_space<vmem>>, vector<32x32xf32>
    %cst = arith.constant dense<0.000000e+00> : vector<16x32xf32>
    %6 = tpu.matmul %4, %5, %cst {dimension_numbers = #tpu.dot_dimension_numbers<[1], [0], [0], [1], [0, 0, 1, 1], [], []>} : vector<16x32xf32>, vector<32x32xf32>, vector<16x32xf32> -> vector<16x32xf32>
    %7 = arith.addf %3, %6 : vector<16x32xf32>
    %c0_6 = arith.constant 0 : index
    %c0_7 = arith.constant 0 : index
    %8 = vector.load %arg7[%c0_6, %c0_7] : memref<16x32xf32, #tpu.memory_space<vmem>>, vector<16x32xf32>
    tpu.vector_store %arg7[%c0_6, %c0_7], %7 {strides = array<i32>} : memref<16x32xf32, #tpu.memory_space<vmem>>, vector<16x32xf32>,
    %c0_i32_8 = arith.constant 0 : i32
    %9 = arith.cmpi eq, %arg2, %c0_i32_8 : i32
    %10 = arith.extui %9 : i1 to i32
    %c0_i32_9 = arith.constant 0 : i32
    %11 = arith.cmpi ne, %10, %c0_i32_9 : i32
    scf.if %11 {
      %c0_10 = arith.constant 0 : index
      %c0_11 = arith.constant 0 : index
      %12 = vector.load %arg7[%c0_10, %c0_11] : memref<16x32xf32, #tpu.memory_space<vmem>>, vector<16x32xf32>
      %c0_12 = arith.constant 0 : index
      %c0_13 = arith.constant 0 : index
      %13 = vector.load %arg5[%c0_12, %c0_13] : memref<1x32xf32, #tpu.memory_space<vmem>>, vector<1x32xf32>
      %14 = vector.broadcast %13 : vector<1x32xf32> to vector<16x32xf32>
      %15 = arith.addf %12, %14 : vector<16x32xf32>
      %c0_14 = arith.constant 0 : index
      %c0_15 = arith.constant 0 : index
      %16 = vector.load %arg6[%c0_14, %c0_15] : memref<16x32xf32, #tpu.memory_space<vmem>>, vector<16x32xf32>
      tpu.vector_store %arg6[%c0_14, %c0_15], %15 {strides = array<i32>} : memref<16x32xf32, #tpu.memory_space<vmem>>, vector<16x32xf32>,
    } else {
    }
    return
  }
  func.func @transform_0(%arg0: i32, %arg1: i32, %arg2: i32) -> (i32, i32) {
    %c0_i32 = arith.constant 0 : i32
    return %arg0, %arg2 : i32, i32
  }
  func.func @transform_1(%arg0: i32, %arg1: i32, %arg2: i32) -> (i32, i32) {
    %c0_i32 = arith.constant 0 : i32
    return %arg2, %arg1 : i32, i32
  }
  func.func @transform_2(%arg0: i32, %arg1: i32, %arg2: i32) -> (i32, i32) {
    %c0_i32 = arith.constant 0 : i32
    %c0_i32_0 = arith.constant 0 : i32
    return %c0_i32, %arg1 : i32, i32
  }
  func.func @transform_3(%arg0: i32, %arg1: i32, %arg2: i32) -> (i32, i32) {
    %c0_i32 = arith.constant 0 : i32
    return %arg0, %arg1 : i32, i32
  }
}

</mosaic_0001>

<llo_original>
// kernel: multihead_self_attention.3
$region0: #{multihead_self_attention.3}
  #allocation0 [shape = 'u32[]', space=smem, size = 0x4, offset = 0x4, fixed_abs, tag = 'smem constant byte address 0x4 - core index']
  #allocation1 [shape = 'u32[72,128]{1,0:T(1,128)}', space=vmem, size = 0x9000, scoped, tag = 'internal scratch']
  #allocation2 [shape = 'f32[16,96]{1,0:T(8,128)}', space=vmem, size = 0x2000, scoped, tag = 'scratch operand']
  %s0 = inlined_call_operand.vmem [shape: f32[16,32], index: 0, kind: input, shape index: {}]
  %s1 = inlined_call_operand.vmem [shape: f32[32,96], index: 1, kind: input, shape index: {}]
  %s2 = inlined_call_operand.vmem [shape: f32[1,96], index: 2, kind: input, shape index: {}]
  %s3 = inlined_call_operand.vmem [shape: f32[16,96], index: 3, kind: output, shape index: {}]
  %s4 = sld [smem:[#allocation0]]
  $region30: #{multihead_self_attention.3} parent=0
    _
  %s6 = ssub.s32 1, %s4
  %s7 = scalar_select 0, %s6, %s4
  // Predicated region
  $region2: #{multihead_self_attention.3} parent=0 // pred_check
    _
  $region3: #{multihead_self_attention.3} parent=0 // pred_check_branch
    %9 = sbr.rel (0) target = $region5
  $region4: #{multihead_self_attention.3} parent=0 // pred_region
    _
  $region5: #{multihead_self_attention.3} parent=0 // pred_fallthru
    _
  // Predicated region
  $region6: #{multihead_self_attention.3} parent=0 // pred_check
    _
  $region7: #{multihead_self_attention.3} parent=0 // pred_check_branch
    %11 = sbr.rel (0) target = $region9
  $region8: #{multihead_self_attention.3} parent=0 // pred_region
    _
  $region9: #{multihead_self_attention.3} parent=0 // pred_fallthru
    _
  // Predicated region
  $region10: #{multihead_self_attention.3} parent=0 // pred_check
    _
  $region11: #{multihead_self_attention.3} parent=0 // pred_check_branch
    %13 = sbr.rel (0) target = $region13
  $region12: #{multihead_self_attention.3} parent=0 // pred_region
    _
  $region13: #{multihead_self_attention.3} parent=0 // pred_fallthru
    _
  %p14 = scmp.eq.s32.totalorder 0, 0
  // Predicated region
  $region14: #{multihead_self_attention.3} parent=0 // pred_check
    %p15 = pneg %p14
  $region15: #{multihead_self_attention.3} parent=0 // pred_check_branch
    %17 = sbr.rel (%p15) target = $region17
  $region16: #{multihead_self_attention.3} parent=0 // pred_region
    %vm18 = vcmask 785408
    %19 = vst.msk [vmem:[#allocation2] sm:$0xff] %vm18, 0.0
    %20 = vst.msk [vmem:[#allocation2 + $0x8] sm:$0xff] %vm18, 0.0
  $region17: #{multihead_self_attention.3} parent=0 // pred_fallthru
    _
  %v21 = vld [vmem:[#allocation2] sm:$0xff]
  %v22 = vld [vmem:[#allocation2 + $0x8] sm:$0xff]
  %v23 = vld [vmem:[%s0] sm:$0xff]
  %v24 = vld [vmem:[%s0 + $0x8] sm:$0xff]
  %v25 = vld [vmem:[%s1] sm:$0xff]
  %v26 = vld [vmem:[%s1 + $0x8] sm:$0xff]
  %v27 = vld [vmem:[%s1 + $0x10] sm:$0xff]
  %v28 = vld [vmem:[%s1 + $0x18] sm:$0xff]
  %vm29 = vcmask 261120
  %v31 = vsel %vm29, %v23, 0
  %v34 = vsel %vm29, %v24, 0
  %36 = vmatpush.msra.mxu0 0.0
  %37 = vmatpush.msra.mxu0 0.0
  %38 = vmatpush.msra.mxu0 0.0
  %39 = vmatpush.msra.mxu0 0.0
  %40 = vmatpush.msra.mxu0 0.0
  %41 = vmatpush.msra.mxu0 0.0
  %42 = vmatpush.msra.mxu0 0.0
  %43 = vmatpush.msra.mxu0 0.0
  %44 = vmatpush.msra.mxu0 0.0
  %45 = vmatpush.msra.mxu0 0.0
  %46 = vmatpush.msra.mxu0 0.0
  %47 = vmatpush.msra.mxu0 0.0
  %48 = vmatpush.msra.mxu0 %v28
  %49 = vmatpush.msra.mxu0 %v27
  %50 = vmatpush.msra.mxu0 %v26
  %51 = vmatpush.msra.mxu0 %v25
  %52 = vmatmul.f32.gmra.mxu0 %v31
  %v53 = vpop.f32.mrf.mxu0
  %v54 = vadd.f32 0.0, %v53
  %55 = vmatmul.f32.gmra.mxu0 %v34
  %v56 = vpop.f32.mrf.mxu0
  %v57 = vadd.f32 0.0, %v56
  %58 = vdwg.mxu0
  %v59 = vadd.f32 %v21, %v54
  %v60 = vadd.f32 %v22, %v57
  %vm61 = vcmask 785408
  %62 = vst.msk [vmem:[#allocation2] sm:$0xff] %vm61, %v59
  %63 = vst.msk [vmem:[#allocation2 + $0x8] sm:$0xff] %vm61, %v60
  // Predicated region
  $region18: #{multihead_self_attention.3} parent=0 // pred_check
    %p64 = pneg %p14
  $region19: #{multihead_self_attention.3} parent=0 // pred_check_branch
    %66 = sbr.rel (%p64) target = $region21
  $region20: #{multihead_self_attention.3} parent=0 // pred_region
    %v67 = vld [vmem:[#allocation2] sm:$0xff]
    %v68 = vld [vmem:[#allocation2 + $0x8] sm:$0xff]
    %v69 = vld [vmem:[%s2] sm:$0x1]
    %v71 = vperm.slane %v69, 0
    %v73 = vadd.f32 %v67, %v71
    %v74 = vadd.f32 %v68, %v71
    %75 = vst.msk [vmem:[%s3] sm:$0xff] %vm61, %v73
    %76 = vst.msk [vmem:[%s3 + $0x8] sm:$0xff] %vm61, %v74
  $region21: #{multihead_self_attention.3} parent=0 // pred_fallthru
    _
  // Predicated region
  $region22: #{multihead_self_attention.3} parent=0 // pred_check
    _
  $region23: #{multihead_self_attention.3} parent=0 // pred_check_branch
    %78 = sbr.rel (0) target = $region25
  $region24: #{multihead_self_attention.3} parent=0 // pred_region
    _
  $region25: #{multihead_self_attention.3} parent=0 // pred_fallthru
    _
  // Predicated region
  $region26: #{multihead_self_attention.3} parent=0 // pred_check
    _
  $region27: #{multihead_self_attention.3} parent=0 // pred_check_branch
    %80 = sbr.rel (0) target = $region29
  $region28: #{multihead_self_attention.3} parent=0 // pred_region
    _
  $region29: #{multihead_self_attention.3} parent=0 // pred_fallthru
    _

// kernel: multihead_self_attention.5
$region0: #{multihead_self_attention.5}
  #allocation0 [shape = 'u32[]', space=smem, size = 0x4, offset = 0x4, fixed_abs, tag = 'smem constant byte address 0x4 - core index']
  #allocation1 [shape = 'u32[72,128]{1,0:T(1,128)}', space=vmem, size = 0x9000, scoped, tag = 'internal scratch']
  #allocation2 [shape = 'f32[16,32]{1,0:T(8,128)}', space=vmem, size = 0x2000, scoped, tag = 'scratch operand']
  %s0 = inlined_call_operand.vmem [shape: f32[16,32], index: 0, kind: input, shape index: {}]
  %s1 = inlined_call_operand.vmem [shape: f32[32,32], index: 1, kind: input, shape index: {}]
  %s2 = inlined_call_operand.vmem [shape: f32[1,32], index: 2, kind: input, shape index: {}]
  %s3 = inlined_call_operand.vmem [shape: f32[16,32], index: 3, kind: output, shape index: {}]
  %s4 = sld [smem:[#allocation0]]
  $region30: #{multihead_self_attention.5} parent=0
    _
  %s6 = ssub.s32 1, %s4
  %s7 = scalar_select 0, %s6, %s4
  // Predicated region
  $region2: #{multihead_self_attention.5} parent=0 // pred_check
    _
  $region3: #{multihead_self_attention.5} parent=0 // pred_check_branch
    %9 = sbr.rel (0) target = $region5
  $region4: #{multihead_self_attention.5} parent=0 // pred_region
    _
  $region5: #{multihead_self_attention.5} parent=0 // pred_fallthru
    _
  // Predicated region
  $region6: #{multihead_self_attention.5} parent=0 // pred_check
    _
  $region7: #{multihead_self_attention.5} parent=0 // pred_check_branch
    %11 = sbr.rel (0) target = $region9
  $region8: #{multihead_self_attention.5} parent=0 // pred_region
    _
  $region9: #{multihead_self_attention.5} parent=0 // pred_fallthru
    _
  // Predicated region
  $region10: #{multihead_self_attention.5} parent=0 // pred_check
    _
  $region11: #{multihead_self_attention.5} parent=0 // pred_check_branch
    %13 = sbr.rel (0) target = $region13
  $region12: #{multihead_self_attention.5} parent=0 // pred_region
    _
  $region13: #{multihead_self_attention.5} parent=0 // pred_fallthru
    _
  %p14 = scmp.eq.s32.totalorder 0, 0
  // Predicated region
  $region14: #{multihead_self_attention.5} parent=0 // pred_check
    %p15 = pneg %p14
  $region15: #{multihead_self_attention.5} parent=0 // pred_check_branch
    %17 = sbr.rel (%p15) target = $region17
  $region16: #{multihead_self_attention.5} parent=0 // pred_region
    %vm18 = vcmask 261120
    %19 = vst.msk [vmem:[#allocation2] sm:$0xff] %vm18, 0.0
    %20 = vst.msk [vmem:[#allocation2 + $0x8] sm:$0xff] %vm18, 0.0
  $region17: #{multihead_self_attention.5} parent=0 // pred_fallthru
    _
  %v21 = vld [vmem:[#allocation2] sm:$0xff]
  %v22 = vld [vmem:[#allocation2 + $0x8] sm:$0xff]
  %v23 = vld [vmem:[%s0] sm:$0xff]
  %v24 = vld [vmem:[%s0 + $0x8] sm:$0xff]
  %v25 = vld [vmem:[%s1] sm:$0xff]
  %v26 = vld [vmem:[%s1 + $0x8] sm:$0xff]
  %v27 = vld [vmem:[%s1 + $0x10] sm:$0xff]
  %v28 = vld [vmem:[%s1 + $0x18] sm:$0xff]
  %vm29 = vcmask 261120
  %v31 = vsel %vm29, %v23, 0
  %v34 = vsel %vm29, %v24, 0
  %36 = vmatpush.msra.mxu0 0.0
  %37 = vmatpush.msra.mxu0 0.0
  %38 = vmatpush.msra.mxu0 0.0
  %39 = vmatpush.msra.mxu0 0.0
  %40 = vmatpush.msra.mxu0 0.0
  %41 = vmatpush.msra.mxu0 0.0
  %42 = vmatpush.msra.mxu0 0.0
  %43 = vmatpush.msra.mxu0 0.0
  %44 = vmatpush.msra.mxu0 0.0
  %45 = vmatpush.msra.mxu0 0.0
  %46 = vmatpush.msra.mxu0 0.0
  %47 = vmatpush.msra.mxu0 0.0
  %48 = vmatpush.msra.mxu0 %v28
  %49 = vmatpush.msra.mxu0 %v27
  %50 = vmatpush.msra.mxu0 %v26
  %51 = vmatpush.msra.mxu0 %v25
  %52 = vmatmul.f32.gmra.mxu0 %v31
  %v53 = vpop.f32.mrf.mxu0
  %v54 = vadd.f32 0.0, %v53
  %55 = vmatmul.f32.gmra.mxu0 %v34
  %v56 = vpop.f32.mrf.mxu0
  %v57 = vadd.f32 0.0, %v56
  %58 = vdwg.mxu0
  %v59 = vadd.f32 %v21, %v54
  %v60 = vadd.f32 %v22, %v57
  %61 = vst.msk [vmem:[#allocation2] sm:$0xff] %vm29, %v59
  %62 = vst.msk [vmem:[#allocation2 + $0x8] sm:$0xff] %vm29, %v60
  // Predicated region
  $region18: #{multihead_self_attention.5} parent=0 // pred_check
    %p63 = pneg %p14
  $region19: #{multihead_self_attention.5} parent=0 // pred_check_branch
    %65 = sbr.rel (%p63) target = $region21
  $region20: #{multihead_self_attention.5} parent=0 // pred_region
    %v66 = vld [vmem:[#allocation2] sm:$0xff]
    %v67 = vld [vmem:[#allocation2 + $0x8] sm:$0xff]
    %v68 = vld [vmem:[%s2] sm:$0x1]
    %v70 = vperm.slane %v68, 0
    %v72 = vadd.f32 %v66, %v70
    %v73 = vadd.f32 %v67, %v70
    %74 = vst.msk [vmem:[%s3] sm:$0xff] %vm29, %v72
    %75 = vst.msk [vmem:[%s3 + $0x8] sm:$0xff] %vm29, %v73
  $region21: #{multihead_self_attention.5} parent=0 // pred_fallthru
    _
  // Predicated region
  $region22: #{multihead_self_attention.5} parent=0 // pred_check
    _
  $region23: #{multihead_self_attention.5} parent=0 // pred_check_branch
    %77 = sbr.rel (0) target = $region25
  $region24: #{multihead_self_attention.5} parent=0 // pred_region
    _
  $region25: #{multihead_self_attention.5} parent=0 // pred_fallthru
    _
  // Predicated region
  $region26: #{multihead_self_attention.5} parent=0 // pred_check
    _
  $region27: #{multihead_self_attention.5} parent=0 // pred_check_branch
    %79 = sbr.rel (0) target = $region29
  $region28: #{multihead_self_attention.5} parent=0 // pred_region
    _
  $region29: #{multihead_self_attention.5} parent=0 // pred_fallthru
    _

// kernel: multihead_self_attention.4
$region0: #{multihead_self_attention.4}
  #allocation0 [shape = 'u32[]', space=smem, size = 0x4, offset = 0x4, fixed_abs, tag = 'smem constant byte address 0x4 - core index']
  #allocation1 [shape = 'u32[72,128]{1,0:T(1,128)}', space=vmem, size = 0x9000, scoped, tag = 'internal scratch']
  %s0 = inlined_call_operand.vmem [shape: f32[2,4,8,8], index: 0, kind: input, shape index: {}]
  %s1 = inlined_call_operand.vmem [shape: f32[2,4,8,8], index: 1, kind: input, shape index: {}]
  %s2 = inlined_call_operand.vmem [shape: f32[2,4,8,8], index: 2, kind: input, shape index: {}]
  %s3 = inlined_call_operand.vmem [shape: f32[2,4,8,8], index: 3, kind: output, shape index: {0}]
  %s4 = inlined_call_operand.hbm [shape: f32[2,8,8], index: 4, kind: output, shape index: {1}]
  %5 = xla_tuple %s3, %s4
  %s6 = sld [smem:[#allocation0]]
  $region53: #{multihead_self_attention.4} parent=0
    _
  %s8 = ssub.s32 1, %s6
  %s9 = scalar_select 0, %s8, %s6
  $region1: #{multihead_self_attention.4} parent=0
    #allocation2 [shape = 'u8[8192]{0}', space=vmem, size = 0x2000, scoped, tag = 'output window, operand 1']
    #allocation3 [shape = 's32[2]{0}', space=sflag, size = 0x8, scoped, tag = 'scoped memory for multihead_self_attention.4']
    %10 = vsyncpa [#allocation3], 0
    %s11 = scalar_lea.sflag [#allocation3], 1
    %12 = vsyncpa %s11, 0
    loop: start=0, step=1, limit=4
    $region2: #{multihead_self_attention.4} parent=1 // loop_pre_header
      _
    $region3: #{multihead_self_attention.4} parent=1 // loop_header
      %s14 = sphi 0, %s18
      %p15 = scmp.ge.s32.totalorder %s14, 4
      %s21 = sphi 0, %s33
      %s22 = sphi 0, %s29
      %s23 = sphi 0, %s21
      %s24 = sphi 0, %s22
      %s25 = sphi 0, %s23
      %s26 = sphi 0, %s24
      %s38 = sphi 0, %s40
      %s41 = sphi 0, %s38
      %s42 = sphi 0, %s41
      %s58 = sphi 0, %s42
      %s64 = sphi 0, %s66
      %s67 = sphi 0, %s64
      %s68 = sphi 0, %s67
      %s84 = sphi 0, %s68
      %s90 = sphi 0, %s92
      %s93 = sphi 0, %s90
      %s94 = sphi 0, %s93
      %s110 = sphi 0, %s94
      %s118 = sphi 0, %s120
      %s121 = sphi 0, %s118
      %s122 = sphi 0, %s121
      %s138 = sphi 0, %s122
      %s146 = sphi 0, %s148
      %s149 = sphi 0, %s146
      %s150 = sphi 0, %s149
      %s166 = sphi 0, %s150
    $region4: #{multihead_self_attention.4} parent=1 // loop_header_branch
      %17 = sbr.rel (%p15) target = $region8
    $region5: #{multihead_self_attention.4} parent=1 // loop_body
      %s19 = ssub.s32 %s14, 1
      %s20 = ssub.s32 %s14, 2
      %s27 = sadd.s32 1, %s22
      %p28 = scmp.ge.s32.totalorder %s27, 1
      %s29 = scalar_select %p28, 0, %s27
      %s30 = sadd.s32 1, %s21
      %s31 = scalar_select %p28, %s30, %s21
      %p32 = scmp.ge.s32.totalorder %s31, 2
      %s33 = scalar_select %p32, 0, %s31
      %s34 = ssub.s32 %s21, %s33
      %s35 = ssub.s32 %s22, %s29
      %s36 = sor.u32 %s34, %s35
      %p37 = scmp.eq.s32.totalorder %s36, 0
      %s39 = sadd.s32 %s38, 1
      %s40 = scalar_select %p37, %s38, %s39
      %p43 = pneg %p37
      %p44 = scmp.eq.s32.totalorder %s14, 1
      %p45 = por %p43, %p44
      %p46 = scmp.ne.s32.totalorder %s38, %s41
      %p47 = scmp.eq.s32.totalorder %s14, 0
      %p48 = por %p46, %p47
      %p49 = scmp.ne.s32.totalorder %s38, %s41
      %p50 = scmp.eq.s32.totalorder %s19, 1
      %p51 = por %p49, %p50
      %p52 = scmp.ne.s32.totalorder %s41, %s42
      %p53 = scmp.eq.s32.totalorder %s19, 0
      %p54 = por %p52, %p53
      %p55 = scmp.ne.s32.totalorder %s41, %s42
      %p56 = scmp.eq.s32.totalorder %s20, 1
      %p57 = por %p55, %p56
      %p59 = scmp.ne.s32.totalorder %s42, %s58
      %p60 = scmp.eq.s32.totalorder %s20, 0
      %p61 = por %p59, %p60
      %s62 = ssub.s32 %s21, %s33
      %p63 = scmp.eq.s32.totalorder %s62, 0
      %s65 = sadd.s32 %s64, 1
      %s66 = scalar_select %p63, %s64, %s65
      %p69 = pneg %p63
      %p70 = scmp.eq.s32.totalorder %s14, 1
      %p71 = por %p69, %p70
      %p72 = scmp.ne.s32.totalorder %s64, %s67
      %p73 = scmp.eq.s32.totalorder %s14, 0
      %p74 = por %p72, %p73
      %p75 = scmp.ne.s32.totalorder %s64, %s67
      %p76 = scmp.eq.s32.totalorder %s19, 1
      %p77 = por %p75, %p76
      %p78 = scmp.ne.s32.totalorder %s67, %s68
      %p79 = scmp.eq.s32.totalorder %s19, 0
      %p80 = por %p78, %p79
      %p81 = scmp.ne.s32.totalorder %s67, %s68
      %p82 = scmp.eq.s32.totalorder %s20, 1
      %p83 = por %p81, %p82
      %p85 = scmp.ne.s32.totalorder %s68, %s84
      %p86 = scmp.eq.s32.totalorder %s20, 0
      %p87 = por %p85, %p86
      %s88 = ssub.s32 %s21, %s33
      %p89 = scmp.eq.s32.totalorder %s88, 0
      %s91 = sadd.s32 %s90, 1
      %s92 = scalar_select %p89, %s90, %s91
      %p95 = pneg %p89
      %p96 = scmp.eq.s32.totalorder %s14, 1
      %p97 = por %p95, %p96
      %p98 = scmp.ne.s32.totalorder %s90, %s93
      %p99 = scmp.eq.s32.totalorder %s14, 0
      %p100 = por %p98, %p99
      %p101 = scmp.ne.s32.totalorder %s90, %s93
      %p102 = scmp.eq.s32.totalorder %s19, 1
      %p103 = por %p101, %p102
      %p104 = scmp.ne.s32.totalorder %s93, %s94
      %p105 = scmp.eq.s32.totalorder %s19, 0
      %p106 = por %p104, %p105
      %p107 = scmp.ne.s32.totalorder %s93, %s94
      %p108 = scmp.eq.s32.totalorder %s20, 1
      %p109 = por %p107, %p108
      %p111 = scmp.ne.s32.totalorder %s94, %s110
      %p112 = scmp.eq.s32.totalorder %s20, 0
      %p113 = por %p111, %p112
      %s114 = ssub.s32 %s21, %s33
      %s115 = ssub.s32 %s22, %s29
      %s116 = sor.u32 %s114, %s115
      %p117 = scmp.eq.s32.totalorder %s116, 0
      %s119 = sadd.s32 %s118, 1
      %s120 = scalar_select %p117, %s118, %s119
      %p123 = pneg %p117
      %p124 = scmp.eq.s32.totalorder %s14, 1
      %p125 = por %p123, %p124
      %p126 = scmp.ne.s32.totalorder %s118, %s121
      %p127 = scmp.eq.s32.totalorder %s14, 0
      %p128 = por %p126, %p127
      %p129 = scmp.ne.s32.totalorder %s118, %s121
      %p130 = scmp.eq.s32.totalorder %s19, 1
      %p131 = por %p129, %p130
      %p132 = scmp.ne.s32.totalorder %s121, %s122
      %p133 = scmp.eq.s32.totalorder %s19, 0
      %p134 = por %p132, %p133
      %p135 = scmp.ne.s32.totalorder %s121, %s122
      %p136 = scmp.eq.s32.totalorder %s20, 1
      %p137 = por %p135, %p136
      %p139 = scmp.ne.s32.totalorder %s122, %s138
      %p140 = scmp.eq.s32.totalorder %s20, 0
      %p141 = por %p139, %p140
      %s142 = ssub.s32 %s21, %s33
      %s143 = ssub.s32 %s22, %s29
      %s144 = sor.u32 %s142, %s143
      %p145 = scmp.eq.s32.totalorder %s144, 0
      %s147 = sadd.s32 %s146, 1
      %s148 = scalar_select %p145, %s146, %s147
      %p151 = pneg %p145
      %p152 = scmp.eq.s32.totalorder %s14, 1
      %p153 = por %p151, %p152
      %p154 = scmp.ne.s32.totalorder %s146, %s149
      %p155 = scmp.eq.s32.totalorder %s14, 0
      %p156 = por %p154, %p155
      %p157 = scmp.ne.s32.totalorder %s146, %s149
      %p158 = scmp.eq.s32.totalorder %s19, 1
      %p159 = por %p157, %p158
      %p160 = scmp.ne.s32.totalorder %s149, %s150
      %p161 = scmp.eq.s32.totalorder %s19, 0
      %p162 = por %p160, %p161
      %p163 = scmp.ne.s32.totalorder %s149, %s150
      %p164 = scmp.eq.s32.totalorder %s20, 1
      %p165 = por %p163, %p164
      %p167 = scmp.ne.s32.totalorder %s150, %s166
      %p168 = scmp.eq.s32.totalorder %s20, 0
      %p169 = por %p167, %p168
      %p170 = scmp.le.s32.totalorder 1, %s14
      %p171 = scmp.lt.s32.totalorder %s14, 3
      %p172 = pnand %p170, %p171
      %p173 = pneg %p172
      // Predicated region
      $region9: #{multihead_self_attention.4} parent=5 // pred_check
        _
      $region10: #{multihead_self_attention.4} parent=5 // pred_check_branch
        %175 = sbr.rel (%p172) target = $region12
      $region11: #{multihead_self_attention.4} parent=5 // pred_region
        %s176 = ssub.s32 %s14, 1
      $region12: #{multihead_self_attention.4} parent=5 // pred_fallthru
        _
      %p177 = scmp.lt.s32.totalorder %s14, 2
      // Predicated region
      $region13: #{multihead_self_attention.4} parent=5 // pred_check
        %p178 = pneg %p177
      $region14: #{multihead_self_attention.4} parent=5 // pred_check_branch
        %180 = sbr.rel (%p178) target = $region16
      $region15: #{multihead_self_attention.4} parent=5 // pred_region
        // Predicated region
        $region17: #{multihead_self_attention.4} parent=15 // pred_check
          %p181 = pneg %p48
        $region18: #{multihead_self_attention.4} parent=15 // pred_check_branch
          %183 = sbr.rel (%p181) target = $region20
        $region19: #{multihead_self_attention.4} parent=15 // pred_region
          %p184 = scmp.lt.s32.totalorder %s21, 1
          %s185 = scalar_select %p184, %s21, 1
          %p186 = scmp.lt.s32.totalorder %s22, 0
          %s187 = scalar_select %p186, %s22, 0
          %s188 = smul.addr %s185, 4
          %s189 = sadd.s32 %s187, %s188
          %s190 = smul.addr %s189, 8
          %s191 = scalar_lea.vmem %s0, %s190
        $region20: #{multihead_self_attention.4} parent=15 // pred_fallthru
          _
        // Predicated region
        $region21: #{multihead_self_attention.4} parent=15 // pred_check
          %p192 = pneg %p74
        $region22: #{multihead_self_attention.4} parent=15 // pred_check_branch
          %194 = sbr.rel (%p192) target = $region24
        $region23: #{multihead_self_attention.4} parent=15 // pred_region
          %p195 = scmp.lt.s32.totalorder %s21, 1
          %s196 = scalar_select %p195, %s21, 1
          %s197 = smul.addr %s196, 4
          %s198 = smul.addr %s197, 8
          %s199 = scalar_lea.vmem %s1, %s198
        $region24: #{multihead_self_attention.4} parent=15 // pred_fallthru
          _
        // Predicated region
        $region25: #{multihead_self_attention.4} parent=15 // pred_check
          %p200 = pneg %p100
        $region26: #{multihead_self_attention.4} parent=15 // pred_check_branch
          %202 = sbr.rel (%p200) target = $region28
        $region27: #{multihead_self_attention.4} parent=15 // pred_region
          %p203 = scmp.lt.s32.totalorder %s21, 1
          %s204 = scalar_select %p203, %s21, 1
          %s205 = smul.addr %s204, 4
          %s206 = smul.addr %s205, 8
          %s207 = scalar_lea.vmem %s2, %s206
        $region28: #{multihead_self_attention.4} parent=15 // pred_fallthru
          _
      $region16: #{multihead_self_attention.4} parent=5 // pred_fallthru
        _
      %p208 = scmp.le.s32.totalorder 1, %s14
      %p209 = scmp.lt.s32.totalorder %s14, 3
      %p210 = pnand %p208, %p209
      %p211 = pneg %p210
      // Predicated region
      $region29: #{multihead_self_attention.4} parent=5 // pred_check
        _
      $region30: #{multihead_self_attention.4} parent=5 // pred_check_branch
        %213 = sbr.rel (%p210) target = $region32
      $region31: #{multihead_self_attention.4} parent=5 // pred_region
        %s214 = ssub.s32 %s14, 1
        %p215 = scmp.lt.s32.totalorder %s23, 1
        %s216 = scalar_select %p215, %s23, 1
        %p217 = scmp.lt.s32.totalorder %s24, 0
        %s218 = scalar_select %p217, %s24, 0
        %s219 = smul.addr %s216, 4
        %s220 = sadd.s32 %s218, %s219
        %s221 = smul.addr %s220, 8
        %s222 = scalar_lea.vmem %s0, %s221
        %p223 = pneg %p54
        %p224 = pneg %p51
        %p225 = scmp.lt.s32.totalorder %s23, 1
        %s226 = scalar_select %p225, %s23, 1
        %s227 = smul.addr %s226, 4
        %s228 = smul.addr %s227, 8
        %s229 = scalar_lea.vmem %s1, %s228
        %p230 = pneg %p80
        %p231 = pneg %p77
        %p232 = scmp.lt.s32.totalorder %s23, 1
        %s233 = scalar_select %p232, %s23, 1
        %s234 = smul.addr %s233, 4
        %s235 = smul.addr %s234, 8
        %s236 = scalar_lea.vmem %s2, %s235
        %p237 = pneg %p106
        %p238 = pneg %p103
        %p239 = pneg %p134
        %p240 = pneg %p131
        %p241 = scmp.lt.s32.totalorder %s23, 1
        %s242 = scalar_select %p241, %s23, 1
        %p243 = scmp.lt.s32.totalorder %s24, 0
        %s244 = scalar_select %p243, %s24, 0
        %s245 = smul.addr %s242, 4
        %s246 = sadd.s32 %s244, %s245
        %s247 = smul.addr %s246, 8
        %s248 = scalar_lea.vmem %s3, %s247
        %p249 = pneg %p162
        %p250 = pneg %p159
        %s251 = sand.u32 %s149, 1
        %s252 = scalar_lea.sflag [#allocation3], %s251
        %s253 = sand.u32 %s149, 1
        %s254 = smul.addr %s253, 8
        %s255 = scalar_lea.vmem [#allocation2], %s254
        %p256 = scmp.lt.s32.totalorder %s23, 1
        %s257 = scalar_select %p256, %s23, 1
        %p258 = scmp.lt.s32.totalorder %s24, 0
        %s259 = scalar_select %p258, %s24, 0
        %s260 = smul.addr %s257, 4
        %s261 = sadd.s32 %s259, %s260
        %s262 = smul.addr %s261, 8
        %s263 = scalar_lea.vmem %s0, %s262
        %p264 = scmp.lt.s32.totalorder %s23, 1
        %s265 = scalar_select %p264, %s23, 1
        %s266 = smul.addr %s265, 4
        %s267 = smul.addr %s266, 8
        %s268 = scalar_lea.vmem %s1, %s267
        %p269 = scmp.lt.s32.totalorder %s23, 1
        %s270 = scalar_select %p269, %s23, 1
        %s271 = smul.addr %s270, 4
        %s272 = smul.addr %s271, 8
        %s273 = scalar_lea.vmem %s2, %s272
        %p274 = scmp.lt.s32.totalorder %s23, 1
        %s275 = scalar_select %p274, %s23, 1
        %p276 = scmp.lt.s32.totalorder %s24, 0
        %s277 = scalar_select %p276, %s24, 0
        %s278 = smul.addr %s275, 4
        %s279 = sadd.s32 %s277, %s278
        %s280 = smul.addr %s279, 8
        %s281 = scalar_lea.vmem %s3, %s280
        %v282 = vld [vmem:[%s263] sm:$0xff]
        %v283 = vld [vmem:[%s263 + $0x8] sm:$0xff]
        %v284 = vld [vmem:[%s263 + $0x10] sm:$0xff]
        %v285 = vld [vmem:[%s263 + $0x18] sm:$0xff]
        %v286 = vld [vmem:[%s268] sm:$0xff]
        %v287 = vld [vmem:[%s268 + $0x8] sm:$0xff]
        %v288 = vld [vmem:[%s268 + $0x10] sm:$0xff]
        %v289 = vld [vmem:[%s268 + $0x18] sm:$0xff]
        %v290 = vld [vmem:[%s273] sm:$0xff]
        %v291 = vld [vmem:[%s273 + $0x8] sm:$0xff]
        %v292 = vld [vmem:[%s273 + $0x10] sm:$0xff]
        %v293 = vld [vmem:[%s273 + $0x18] sm:$0xff]
        %vm294 = vcmask 64512
        %v296 = vsel %vm294, %v282, 0
        %v299 = vsel %vm294, %v286, 0
        %301 = vmatpush.xpose.msra.mxu0 0.0
        %302 = vmatpush.xpose.msra.mxu0 0.0
        %303 = vmatpush.xpose.msra.mxu0 0.0
        %304 = vmatpush.xpose.msra.mxu0 0.0
        %305 = vmatpush.xpose.msra.mxu0 0.0
        %306 = vmatpush.xpose.msra.mxu0 0.0
        %307 = vmatpush.xpose.msra.mxu0 0.0
        %308 = vmatpush.xpose.msra.mxu0 0.0
        %309 = vmatpush.xpose.msra.mxu0 0.0
        %310 = vmatpush.xpose.msra.mxu0 0.0
        %311 = vmatpush.xpose.msra.mxu0 0.0
        %312 = vmatpush.xpose.msra.mxu0 0.0
        %313 = vmatpush.xpose.msra.mxu0 0.0
        %314 = vmatpush.xpose.msra.mxu0 0.0
        %315 = vmatpush.xpose.msra.mxu0 0.0
        %316 = vmatpush.xpose.msra.mxu0 %v299
        %317 = vmatmul.f32.gmra.mxu0 %v296
        %v318 = vpop.f32.mrf.mxu0
        %v319 = vadd.f32 0.0, %v318
        %320 = vdwg.mxu0
        %v322 = vsel %vm294, %v283, 0
        %v325 = vsel %vm294, %v287, 0
        %327 = vmatpush.xpose.msra.mxu0 0.0
        %328 = vmatpush.xpose.msra.mxu0 0.0
        %329 = vmatpush.xpose.msra.mxu0 0.0
        %330 = vmatpush.xpose.msra.mxu0 0.0
        %331 = vmatpush.xpose.msra.mxu0 0.0
        %332 = vmatpush.xpose.msra.mxu0 0.0
        %333 = vmatpush.xpose.msra.mxu0 0.0
        %334 = vmatpush.xpose.msra.mxu0 0.0
        %335 = vmatpush.xpose.msra.mxu0 0.0
        %336 = vmatpush.xpose.msra.mxu0 0.0
        %337 = vmatpush.xpose.msra.mxu0 0.0
        %338 = vmatpush.xpose.msra.mxu0 0.0
        %339 = vmatpush.xpose.msra.mxu0 0.0
        %340 = vmatpush.xpose.msra.mxu0 0.0
        %341 = vmatpush.xpose.msra.mxu0 0.0
        %342 = vmatpush.xpose.msra.mxu0 %v325
        %343 = vmatmul.f32.gmra.mxu0 %v322
        %v344 = vpop.f32.mrf.mxu0
        %v345 = vadd.f32 0.0, %v344
        %346 = vdwg.mxu0
        %v348 = vsel %vm294, %v284, 0
        %v351 = vsel %vm294, %v288, 0
        %353 = vmatpush.xpose.msra.mxu0 0.0
        %354 = vmatpush.xpose.msra.mxu0 0.0
        %355 = vmatpush.xpose.msra.mxu0 0.0
        %356 = vmatpush.xpose.msra.mxu0 0.0
        %357 = vmatpush.xpose.msra.mxu0 0.0
        %358 = vmatpush.xpose.msra.mxu0 0.0
        %359 = vmatpush.xpose.msra.mxu0 0.0
        %360 = vmatpush.xpose.msra.mxu0 0.0
        %361 = vmatpush.xpose.msra.mxu0 0.0
        %362 = vmatpush.xpose.msra.mxu0 0.0
        %363 = vmatpush.xpose.msra.mxu0 0.0
        %364 = vmatpush.xpose.msra.mxu0 0.0
        %365 = vmatpush.xpose.msra.mxu0 0.0
        %366 = vmatpush.xpose.msra.mxu0 0.0
        %367 = vmatpush.xpose.msra.mxu0 0.0
        %368 = vmatpush.xpose.msra.mxu0 %v351
        %369 = vmatmul.f32.gmra.mxu0 %v348
        %v370 = vpop.f32.mrf.mxu0
        %v371 = vadd.f32 0.0, %v370
        %372 = vdwg.mxu0
        %v374 = vsel %vm294, %v285, 0
        %v377 = vsel %vm294, %v289, 0
        %379 = vmatpush.xpose.msra.mxu0 0.0
        %380 = vmatpush.xpose.msra.mxu0 0.0
        %381 = vmatpush.xpose.msra.mxu0 0.0
        %382 = vmatpush.xpose.msra.mxu0 0.0
        %383 = vmatpush.xpose.msra.mxu0 0.0
        %384 = vmatpush.xpose.msra.mxu0 0.0
        %385 = vmatpush.xpose.msra.mxu0 0.0
        %386 = vmatpush.xpose.msra.mxu0 0.0
        %387 = vmatpush.xpose.msra.mxu0 0.0
        %388 = vmatpush.xpose.msra.mxu0 0.0
        %389 = vmatpush.xpose.msra.mxu0 0.0
        %390 = vmatpush.xpose.msra.mxu0 0.0
        %391 = vmatpush.xpose.msra.mxu0 0.0
        %392 = vmatpush.xpose.msra.mxu0 0.0
        %393 = vmatpush.xpose.msra.mxu0 0.0
        %394 = vmatpush.xpose.msra.mxu0 %v377
        %395 = vmatmul.f32.gmra.mxu0 %v374
        %v396 = vpop.f32.mrf.mxu0
        %v397 = vadd.f32 0.0, %v396
        %398 = vdwg.mxu0
        %v399 = vsel %vm294, %v319, -inf
        %400 = vmax.xlane.f32.xlu0 %v399
        %v401 = vpop.xlane.xlu0 %400
        %v402 = vsel %vm294, %v345, -inf
        %403 = vmax.xlane.f32.xlu0 %v402
        %v404 = vpop.xlane.xlu0 %403
        %v405 = vsel %vm294, %v371, -inf
        %406 = vmax.xlane.f32.xlu0 %v405
        %v407 = vpop.xlane.xlu0 %406
        %v408 = vsel %vm294, %v397, -inf
        %409 = vmax.xlane.f32.xlu0 %v408
        %v410 = vpop.xlane.xlu0 %409
        %v411 = vsub.f32 %v319, %v401
        %v412 = vsub.f32 %v345, %v404
        %v413 = vsub.f32 %v371, %v407
        %v414 = vsub.f32 %v397, %v410
        %v415 = vmul.f32 %v411, 1.442695
        %v416 = vpow.pop %v415
        %v417 = vmul.f32 %v412, 1.442695
        %v418 = vpow.pop %v417
        %v419 = vmul.f32 %v413, 1.442695
        %v420 = vpow.pop %v419
        %v421 = vmul.f32 %v414, 1.442695
        %v422 = vpow.pop %v421
        %v423 = vsel %vm294, %v416, 0.0
        %424 = vadd.xlane.f32.xlu0 %v423
        %v425 = vpop.xlane.xlu0 %424
        %v426 = vsel %vm294, %v418, 0.0
        %427 = vadd.xlane.f32.xlu0 %v426
        %v428 = vpop.xlane.xlu0 %427
        %v429 = vsel %vm294, %v420, 0.0
        %430 = vadd.xlane.f32.xlu0 %v429
        %v431 = vpop.xlane.xlu0 %430
        %v432 = vsel %vm294, %v422, 0.0
        %433 = vadd.xlane.f32.xlu0 %v432
        %v434 = vpop.xlane.xlu0 %433
        %v435 = vrcp.pop %v425
        %v436 = vrcp.pop %v428
        %v437 = vrcp.pop %v431
        %v438 = vrcp.pop %v434
        %v439 = vmul.f32 %v416, %v435
        %v440 = vmul.f32 %v418, %v436
        %v441 = vmul.f32 %v420, %v437
        %v442 = vmul.f32 %v422, %v438
        %v444 = vsel %vm294, %v439, 0
        %446 = vmatpush.msra.mxu0 0.0
        %447 = vmatpush.msra.mxu0 0.0
        %448 = vmatpush.msra.mxu0 0.0
        %449 = vmatpush.msra.mxu0 0.0
        %450 = vmatpush.msra.mxu0 0.0
        %451 = vmatpush.msra.mxu0 0.0
        %452 = vmatpush.msra.mxu0 0.0
        %453 = vmatpush.msra.mxu0 0.0
        %454 = vmatpush.msra.mxu0 0.0
        %455 = vmatpush.msra.mxu0 0.0
        %456 = vmatpush.msra.mxu0 0.0
        %457 = vmatpush.msra.mxu0 0.0
        %458 = vmatpush.msra.mxu0 0.0
        %459 = vmatpush.msra.mxu0 0.0
        %460 = vmatpush.msra.mxu0 0.0
        %461 = vmatpush.msra.mxu0 %v290
        %462 = vmatmul.f32.gmra.mxu0 %v444
        %v463 = vpop.f32.mrf.mxu0
        %v464 = vadd.f32 0.0, %v463
        %465 = vdwg.mxu0
        %v467 = vsel %vm294, %v440, 0
        %469 = vmatpush.msra.mxu0 0.0
        %470 = vmatpush.msra.mxu0 0.0
        %471 = vmatpush.msra.mxu0 0.0
        %472 = vmatpush.msra.mxu0 0.0
        %473 = vmatpush.msra.mxu0 0.0
        %474 = vmatpush.msra.mxu0 0.0
        %475 = vmatpush.msra.mxu0 0.0
        %476 = vmatpush.msra.mxu0 0.0
        %477 = vmatpush.msra.mxu0 0.0
        %478 = vmatpush.msra.mxu0 0.0
        %479 = vmatpush.msra.mxu0 0.0
        %480 = vmatpush.msra.mxu0 0.0
        %481 = vmatpush.msra.mxu0 0.0
        %482 = vmatpush.msra.mxu0 0.0
        %483 = vmatpush.msra.mxu0 0.0
        %484 = vmatpush.msra.mxu0 %v291
        %485 = vmatmul.f32.gmra.mxu0 %v467
        %v486 = vpop.f32.mrf.mxu0
        %v487 = vadd.f32 0.0, %v486
        %488 = vdwg.mxu0
        %v490 = vsel %vm294, %v441, 0
        %492 = vmatpush.msra.mxu0 0.0
        %493 = vmatpush.msra.mxu0 0.0
        %494 = vmatpush.msra.mxu0 0.0
        %495 = vmatpush.msra.mxu0 0.0
        %496 = vmatpush.msra.mxu0 0.0
        %497 = vmatpush.msra.mxu0 0.0
        %498 = vmatpush.msra.mxu0 0.0
        %499 = vmatpush.msra.mxu0 0.0
        %500 = vmatpush.msra.mxu0 0.0
        %501 = vmatpush.msra.mxu0 0.0
        %502 = vmatpush.msra.mxu0 0.0
        %503 = vmatpush.msra.mxu0 0.0
        %504 = vmatpush.msra.mxu0 0.0
        %505 = vmatpush.msra.mxu0 0.0
        %506 = vmatpush.msra.mxu0 0.0
        %507 = vmatpush.msra.mxu0 %v292
        %508 = vmatmul.f32.gmra.mxu0 %v490
        %v509 = vpop.f32.mrf.mxu0
        %v510 = vadd.f32 0.0, %v509
        %511 = vdwg.mxu0
        %v513 = vsel %vm294, %v442, 0
        %515 = vmatpush.msra.mxu0 0.0
        %516 = vmatpush.msra.mxu0 0.0
        %517 = vmatpush.msra.mxu0 0.0
        %518 = vmatpush.msra.mxu0 0.0
        %519 = vmatpush.msra.mxu0 0.0
        %520 = vmatpush.msra.mxu0 0.0
        %521 = vmatpush.msra.mxu0 0.0
        %522 = vmatpush.msra.mxu0 0.0
        %523 = vmatpush.msra.mxu0 0.0
        %524 = vmatpush.msra.mxu0 0.0
        %525 = vmatpush.msra.mxu0 0.0
        %526 = vmatpush.msra.mxu0 0.0
        %527 = vmatpush.msra.mxu0 0.0
        %528 = vmatpush.msra.mxu0 0.0
        %529 = vmatpush.msra.mxu0 0.0
        %530 = vmatpush.msra.mxu0 %v293
        %531 = vmatmul.f32.gmra.mxu0 %v513
        %v532 = vpop.f32.mrf.mxu0
        %v533 = vadd.f32 0.0, %v532
        %534 = vdwg.mxu0
        %535 = vst.msk [vmem:[%s281] sm:$0xff] %vm294, %v464
        %536 = vst.msk [vmem:[%s281 + $0x8] sm:$0xff] %vm294, %v487
        %537 = vst.msk [vmem:[%s281 + $0x10] sm:$0xff] %vm294, %v510
        %538 = vst.msk [vmem:[%s281 + $0x18] sm:$0xff] %vm294, %v533
        %v539 = vsel %vm294, %v439, 0.0
        %v540 = vsel %vm294, %v440, 0.0
        %v541 = vadd.f32 %v539, %v540
        %v542 = vsel %vm294, %v441, 0.0
        %v543 = vadd.f32 %v541, %v542
        %v544 = vsel %vm294, %v442, 0.0
        %v545 = vadd.f32 %v543, %v544
        %v546 = vmul.f32 %v545, 0.25
        %547 = vst.msk [vmem:[%s255] sm:$0xff] %vm294, %v546
        %p548 = scmp.lt.s32.totalorder %s23, 1
        %s549 = scalar_select %p548, %s23, 1
        %p550 = scmp.lt.s32.totalorder %s24, 0
        %s551 = scalar_select %p550, %s24, 0
        %s552 = smul.addr %s549, 4
        %s553 = sadd.s32 %s551, %s552
        %s554 = smul.addr %s553, 8
        %s555 = scalar_lea.vmem %s3, %s554
        %s556 = sand.u32 %s149, 1
        %s557 = scalar_lea.sflag [#allocation3], %s556
        %s558 = sand.u32 %s149, 1
        %s559 = smul.addr %s558, 8
        %s560 = scalar_lea.vmem [#allocation2], %s559
        // Predicated region
        $region33: #{multihead_self_attention.4} parent=31 // pred_check
          %p561 = pneg %p131
        $region34: #{multihead_self_attention.4} parent=31 // pred_check_branch
          %563 = sbr.rel (%p561) target = $region36
        $region35: #{multihead_self_attention.4} parent=31 // pred_region
          _
        $region36: #{multihead_self_attention.4} parent=31 // pred_fallthru
          _
        // Predicated region
        $region37: #{multihead_self_attention.4} parent=31 // pred_check
          %p564 = pneg %p159
        $region38: #{multihead_self_attention.4} parent=31 // pred_check_branch
          %566 = sbr.rel (%p564) target = $region40
        $region39: #{multihead_self_attention.4} parent=31 // pred_region
          %568 = vsyncadd %s557, 0
          %s569 = sadd.s32 %s24, %s23
          %s570 = smul.addr %s569, 8
          %s571 = scalar_lea.hbm %s4, %s570
          %s573 = sshll.u32 %s560, 4
          %s574 = int_to_ptr.vmem [resolvable:$true] %s573
          %s575 = sshll.u32 %s571, 4
          %s576 = int_to_ptr.hbm [resolvable:$true] %s575
          %578 = dma.vmem_to_hbm [thread:$0]  %s574, 128, %s576, %s557
        $region40: #{multihead_self_attention.4} parent=31 // pred_fallthru
          _
      $region32: #{multihead_self_attention.4} parent=5 // pred_fallthru
        _
      %p579 = scmp.le.s32.totalorder 2, %s14
      // Predicated region
      $region41: #{multihead_self_attention.4} parent=5 // pred_check
        %p580 = pneg %p579
      $region42: #{multihead_self_attention.4} parent=5 // pred_check_branch
        %582 = sbr.rel (%p580) target = $region44
      $region43: #{multihead_self_attention.4} parent=5 // pred_region
        %s583 = ssub.s32 %s14, 2
        // Predicated region
        $region45: #{multihead_self_attention.4} parent=43 // pred_check
          %p584 = pneg %p137
        $region46: #{multihead_self_attention.4} parent=43 // pred_check_branch
          %586 = sbr.rel (%p584) target = $region48
        $region47: #{multihead_self_attention.4} parent=43 // pred_region
          %p587 = scmp.lt.s32.totalorder %s25, 1
          %s588 = scalar_select %p587, %s25, 1
          %p589 = scmp.lt.s32.totalorder %s26, 0
          %s590 = scalar_select %p589, %s26, 0
          %s591 = smul.addr %s588, 4
          %s592 = sadd.s32 %s590, %s591
          %s593 = smul.addr %s592, 8
          %s594 = scalar_lea.vmem %s3, %s593
        $region48: #{multihead_self_attention.4} parent=43 // pred_fallthru
          _
        // Predicated region
        $region49: #{multihead_self_attention.4} parent=43 // pred_check
          %p595 = pneg %p165
        $region50: #{multihead_self_attention.4} parent=43 // pred_check_branch
          %597 = sbr.rel (%p595) target = $region52
        $region51: #{multihead_self_attention.4} parent=43 // pred_region
          %s598 = sand.u32 %s150, 1
          %s599 = scalar_lea.sflag [#allocation3], %s598
          %s600 = sand.u32 %s150, 1
          %s601 = smul.addr %s600, 8
          %s602 = scalar_lea.vmem [#allocation2], %s601
          %604 = dma.done %s599, 128
        $region52: #{multihead_self_attention.4} parent=43 // pred_fallthru
          _
      $region44: #{multihead_self_attention.4} parent=5 // pred_fallthru
        _
    $region6: #{multihead_self_attention.4} parent=1 // loop_footer
      %s18 = sadd.s32 1, %s14
    $region7: #{multihead_self_attention.4} parent=1 // loop_footer_branch
      %13 = sbr.rel target = $region3
    $region8: #{multihead_self_attention.4} parent=1 // loop_exit
      _
    %605 = vsyncpa [#allocation3], 1
    %s606 = scalar_lea.sflag [#allocation3], 1
    %607 = vsyncpa %s606, 1

</llo_original>
